<compile_context>
chip_gen: v7x
topology: tpu7x:2x2x1
jax: 0.10.0
libtpu: 0.0.40
codegen_flags: <defaults>
</compile_context>

<pallas_src>
import functools

import jax
import jax.numpy as jnp
from jax import lax
from jax.experimental import pallas as pl
from jax.experimental.pallas import tpu as pltpu


def _round_up(n, m):
    return ((n + m - 1) // m) * m


def _actor_critic_kernel(x_ref,
                         w1_ref, b1_ref,
                         wh_ref, bh_ref,
                         w2_ref, b2_ref,
                         out_ref,
                         *, num_actions):
    # shared trunk: Linear + ReLU (bf16 operands, f32 MXU accumulation)
    h = jnp.dot(x_ref[...], w1_ref[...],
                preferred_element_type=jnp.float32) + b1_ref[...]
    h = jnp.maximum(h, 0.0).astype(jnp.bfloat16)

    # fused head first-layers (actor | critic): one (hidden -> hidden) matmul
    hh = jnp.dot(h, wh_ref[...],
                 preferred_element_type=jnp.float32) + bh_ref[...]
    hh = jnp.maximum(hh, 0.0).astype(jnp.bfloat16)

    # fused block-diagonal second layer: actor logits land in lanes
    # [0, num_actions), critic value in lane num_actions -> single 128-lane
    # MXU matmul, no mid-vreg slicing, no XLU lane-reduce for the value.
    y = jnp.dot(hh, w2_ref[...],
                preferred_element_type=jnp.float32) + b2_ref[...]

    lane = lax.broadcasted_iota(jnp.int32, y.shape, 1)
    act_mask = lane < num_actions
    val_mask = lane == num_actions

    # softmax over action lanes only; masked lanes -> exp underflows to 0
    logits = jnp.where(act_mask, y, -1e30)
    m = jnp.max(logits, axis=-1, keepdims=True)
    e = jnp.exp(logits - m)
    inv = pl.reciprocal(jnp.sum(e, axis=-1, keepdims=True), approx=True)
    probs = e * inv

    # lane-dense packed output: probs in action lanes, value in lane
    # num_actions, zeros elsewhere (sliced off by the wrapper)
    out_ref[...] = jnp.where(val_mask, y, probs).astype(out_ref.dtype)


def actor_critic_forward(x, params, *, block_b=None):
    B, input_size = x.shape
    hidden = params["w1"].shape[1]
    half = hidden // 2
    num_actions = params["wa2"].shape[1]

    # lane-dense output width: probs lanes + 1 value lane, rounded to 128
    out_lanes = 128 * pl.cdiv(num_actions + 1, 128)

    # --- parameter prep (host/XLA side, cheap) ---
    # bf16 matmul operands, f32 biases (added after the f32 accumulation)
    w1 = params["w1"].astype(jnp.bfloat16)
    b1 = params["b1"].astype(jnp.float32)
    wh = jnp.concatenate([params["wa1"], params["wc1"]], axis=1).astype(jnp.bfloat16)
    bh = jnp.concatenate([params["ba1"], params["bc1"]], axis=1).astype(jnp.float32)
    # block-diagonal second layer: rows [0, half) -> wa2 in lanes
    # [0, num_actions); rows [half, hidden) -> wc2 in lane num_actions.
    w2 = jnp.zeros((hidden, out_lanes), jnp.float32)
    w2 = w2.at[:half, :num_actions].set(params["wa2"])
    w2 = w2.at[half:, num_actions].set(params["wc2"].reshape(half))
    w2 = w2.astype(jnp.bfloat16)
    b2 = jnp.zeros((1, out_lanes), jnp.float32)
    b2 = b2.at[:, :num_actions].set(params["ba2"])
    b2 = b2.at[:, num_actions].set(params["bc2"].reshape(()))
    # NOTE: sizing hidden/half as multiples of 128 (256 on v6e/v7x) and
    # padding input_size toward 128 raises MXU utilization for real models.

    x = x.astype(jnp.bfloat16)

    # --- batch tiling: >=2 grid steps when possible (v7x megacore), large
    # tiles to amortize per-step overhead, multiple of 16 sublanes (bf16) ---
    if block_b is None:
        block_b = min(1024, _round_up((B + 1) // 2, 16))
    block_b = max(16, _round_up(block_b, 16))
    B_padded = _round_up(B, block_b)
    if B_padded != B:
        x = jnp.pad(x, ((0, B_padded - B), (0, 0)))
    grid = (B_padded // block_b,)

    def full2d(arr):
        # whole (small) parameter tensor, constant block index -> stays
        # resident in VMEM across grid steps (no per-step re-DMA)
        return pl.BlockSpec(arr.shape, lambda i: (0, 0))

    in_specs = [
        pl.BlockSpec((block_b, input_size), lambda i: (i, 0)),   # x
        full2d(w1), full2d(b1),
        full2d(wh), full2d(bh),
        full2d(w2), full2d(b2),
    ]
    out_specs = pl.BlockSpec((block_b, out_lanes), lambda i: (i, 0))
    # bf16 packed slab halves the dominant output writeback bytes
    out_shape = jax.ShapeDtypeStruct((B_padded, out_lanes), jnp.bfloat16)

    def nbytes(a):
        return a.size * a.dtype.itemsize

    weight_bytes = sum(nbytes(a) for a in (w1, b1, wh, bh, w2, b2))
    io_bytes = 2 * block_b * (input_size + out_lanes) * 2   # double-buffered bf16 tiles
    vmem_limit = int(min(128 << 20,
                         max(32 << 20, 2 * weight_bytes + io_bytes + (8 << 20))))

    kernel = functools.partial(_actor_critic_kernel, num_actions=num_actions)

    packed = pl.pallas_call(
        kernel,
        out_shape=out_shape,
        grid_spec=pltpu.PrefetchScalarGridSpec(
            num_scalar_prefetch=0,
            grid=grid,
            in_specs=in_specs,
            out_specs=out_specs,
        ),
        compiler_params=pltpu.CompilerParams(
            dimension_semantics=("parallel",),
            vmem_limit_bytes=vmem_limit),
    )(x, w1, b1, wh, bh, w2, b2)

    packed = packed.astype(jnp.float32)
    probs = packed[:B, :num_actions]
    value = packed[:B, num_actions:num_actions + 1]
    return probs, value


def init_params(key, input_size, hidden_size, num_actions):
    """Deterministic synthetic init (uniform, nn.Linear-style bounds)."""
    half = hidden_size // 2
    keys = jax.random.split(key, 10)

    def lin(kw, kb, fan_in, fan_out):
        bound = 1.0 / jnp.sqrt(fan_in)
        w = jax.random.uniform(kw, (fan_in, fan_out), jnp.float32, -bound, bound)
        b = jax.random.uniform(kb, (1, fan_out), jnp.float32, -bound, bound)
        return w, b

    w1, b1 = lin(keys[0], keys[1], input_size, hidden_size)
    wa1, ba1 = lin(keys[2], keys[3], hidden_size, half)
    wa2, ba2 = lin(keys[4], keys[5], half, num_actions)
    wc1, bc1 = lin(keys[6], keys[7], hidden_size, half)
    wc2, bc2 = lin(keys[8], keys[9], half, 1)
    return dict(w1=w1, b1=b1, wa1=wa1, ba1=ba1, wa2=wa2, ba2=ba2,
                wc1=wc1, bc1=bc1, wc2=wc2, bc2=bc2)


def reference_forward(x, p):
    h = jnp.maximum(x @ p["w1"] + p["b1"], 0.0)
    ha = jnp.maximum(h @ p["wa1"] + p["ba1"], 0.0)
    logits = ha @ p["wa2"] + p["ba2"]
    probs = jax.nn.softmax(logits, axis=-1)
    hc = jnp.maximum(h @ p["wc1"] + p["bc1"], 0.0)
    value = hc @ p["wc2"] + p["bc2"]
    return probs, value


if __name__ == "__main__":
    B, input_size, hidden_size, num_actions = 8, 16, 32, 4

    key = jax.random.PRNGKey(0)
    kx, kp = jax.random.split(key)
    x = jax.random.normal(kx, (B, input_size), jnp.float32)
    params = init_params(kp, input_size, hidden_size, num_actions)

    probs, value = actor_critic_forward(x, params)
    probs = jax.block_until_ready(probs)
    value = jax.block_until_ready(value)

    probs_ref, value_ref = reference_forward(x, params)
    assert probs.shape == (B, num_actions) and value.shape == (B, 1)
    # bf16 matmul operands + bf16 packed output -> relaxed tolerances
    assert jnp.allclose(probs, probs_ref, atol=2e-2, rtol=2e-2)
    assert jnp.allclose(value, value_ref, atol=2e-2, rtol=2e-2)
    assert jnp.allclose(jnp.sum(probs, axis=-1), 1.0, atol=1e-2)

    # also exercise a non-divisible batch to check the padding path
    x2 = jax.random.normal(jax.random.PRNGKey(1), (5, input_size), jnp.float32)
    p2, v2 = actor_critic_forward(x2, params)
    p2 = jax.block_until_ready(p2)
    p2_ref, v2_ref = reference_forward(x2, params)
    assert jnp.allclose(p2, p2_ref, atol=2e-2, rtol=2e-2)
    assert jnp.allclose(v2, v2_ref, atol=2e-2, rtol=2e-2)

    print("KERNEL_OK")
</pallas_src>

<mosaic_0001>
module attributes {stable_mosaic.version = 11 : i64} {
  func.func @_actor_critic_kernel(%arg0: i32, %arg1: memref<16x16xbf16, #tpu.memory_space<vmem>>, %arg2: memref<16x32xbf16, #tpu.memory_space<vmem>>, %arg3: memref<1x32xf32, #tpu.memory_space<vmem>>, %arg4: memref<32x32xbf16, #tpu.memory_space<vmem>>, %arg5: memref<1x32xf32, #tpu.memory_space<vmem>>, %arg6: memref<32x128xbf16, #tpu.memory_space<vmem>>, %arg7: memref<1x128xf32, #tpu.memory_space<vmem>>, %arg8: memref<16x128xbf16, #tpu.memory_space<vmem>>) attributes {dimension_semantics = [#tpu.dimension_semantics<parallel>], iteration_bounds = array<i64: 1>, scalar_prefetch = 0 : i64, scratch_operands = 0 : i64, tpu.core_type = #tpu.core_type<tc>, window_params = [{transform_indices = @transform_0, window_bounds = array<i64: 16, 16>}, {pipeline_mode = #tpu.pipeline_mode<synchronous>, transform_indices = @transform_1, window_bounds = array<i64: 16, 32>}, {pipeline_mode = #tpu.pipeline_mode<synchronous>, transform_indices = @transform_2, window_bounds = array<i64: 1, 32>}, {pipeline_mode = #tpu.pipeline_mode<synchronous>, transform_indices = @transform_3, window_bounds = array<i64: 32, 32>}, {pipeline_mode = #tpu.pipeline_mode<synchronous>, transform_indices = @transform_4, window_bounds = array<i64: 1, 32>}, {pipeline_mode = #tpu.pipeline_mode<synchronous>, transform_indices = @transform_5, window_bounds = array<i64: 32, 128>}, {pipeline_mode = #tpu.pipeline_mode<synchronous>, transform_indices = @transform_6, window_bounds = array<i64: 1, 128>}, {transform_indices = @transform_7, window_bounds = array<i64: 16, 128>}]} {
    %c0 = arith.constant 0 : index
    %c0_0 = arith.constant 0 : index
    %0 = vector.load %arg1[%c0, %c0_0] : memref<16x16xbf16, #tpu.memory_space<vmem>>, vector<16x16xbf16>
    %c0_1 = arith.constant 0 : index
    %c0_2 = arith.constant 0 : index
    %1 = vector.load %arg2[%c0_1, %c0_2] : memref<16x32xbf16, #tpu.memory_space<vmem>>, vector<16x32xbf16>
    %cst = arith.constant dense<0.000000e+00> : vector<16x32xf32>
    %2 = tpu.matmul %0, %1, %cst {dimension_numbers = #tpu.dot_dimension_numbers<[1], [0], [0], [1], [0, 0, 1, 1], [], []>} : vector<16x16xbf16>, vector<16x32xbf16>, vector<16x32xf32> -> vector<16x32xf32>
    %c0_3 = arith.constant 0 : index
    %c0_4 = arith.constant 0 : index
    %3 = vector.load %arg3[%c0_3, %c0_4] : memref<1x32xf32, #tpu.memory_space<vmem>>, vector<1x32xf32>
    %4 = vector.broadcast %3 : vector<1x32xf32> to vector<16x32xf32>
    %5 = arith.addf %2, %4 : vector<16x32xf32>
    %cst_5 = arith.constant 0.000000e+00 : f32
    %6 = vector.broadcast %cst_5 : f32 to vector<16x32xf32>
    %7 = arith.maximumf %5, %6 : vector<16x32xf32>
    %8 = arith.truncf %7 : vector<16x32xf32> to vector<16x32xbf16>
    %c0_6 = arith.constant 0 : index
    %c0_7 = arith.constant 0 : index
    %9 = vector.load %arg4[%c0_6, %c0_7] : memref<32x32xbf16, #tpu.memory_space<vmem>>, vector<32x32xbf16>
    %cst_8 = arith.constant dense<0.000000e+00> : vector<16x32xf32>
    %10 = tpu.matmul %8, %9, %cst_8 {dimension_numbers = #tpu.dot_dimension_numbers<[1], [0], [0], [1], [0, 0, 1, 1], [], []>} : vector<16x32xbf16>, vector<32x32xbf16>, vector<16x32xf32> -> vector<16x32xf32>
    %c0_9 = arith.constant 0 : index
    %c0_10 = arith.constant 0 : index
    %11 = vector.load %arg5[%c0_9, %c0_10] : memref<1x32xf32, #tpu.memory_space<vmem>>, vector<1x32xf32>
    %12 = vector.broadcast %11 : vector<1x32xf32> to vector<16x32xf32>
    %13 = arith.addf %10, %12 : vector<16x32xf32>
    %cst_11 = arith.constant 0.000000e+00 : f32
    %14 = vector.broadcast %cst_11 : f32 to vector<16x32xf32>
    %15 = arith.maximumf %13, %14 : vector<16x32xf32>
    %16 = arith.truncf %15 : vector<16x32xf32> to vector<16x32xbf16>
    %c0_12 = arith.constant 0 : index
    %c0_13 = arith.constant 0 : index
    %17 = vector.load %arg6[%c0_12, %c0_13] : memref<32x128xbf16, #tpu.memory_space<vmem>>, vector<32x128xbf16>
    %cst_14 = arith.constant dense<0.000000e+00> : vector<16x128xf32>
    %18 = tpu.matmul %16, %17, %cst_14 {dimension_numbers = #tpu.dot_dimension_numbers<[1], [0], [0], [1], [0, 0, 1, 1], [], []>} : vector<16x32xbf16>, vector<32x128xbf16>, vector<16x128xf32> -> vector<16x128xf32>
    %c0_15 = arith.constant 0 : index
    %c0_16 = arith.constant 0 : index
    %19 = vector.load %arg7[%c0_15, %c0_16] : memref<1x128xf32, #tpu.memory_space<vmem>>, vector<1x128xf32>
    %20 = vector.broadcast %19 : vector<1x128xf32> to vector<16x128xf32>
    %21 = arith.addf %18, %20 : vector<16x128xf32>
    %22 = tpu.iota {dimensions = array<i32: 1>} : vector<16x128xi32>
    %c4_i32 = arith.constant 4 : i32
    %23 = vector.broadcast %c4_i32 : i32 to vector<16x128xi32>
    %24 = arith.cmpi slt, %22, %23 : vector<16x128xi32>
    %c4_i32_17 = arith.constant 4 : i32
    %25 = vector.broadcast %c4_i32_17 : i32 to vector<16x128xi32>
    %26 = arith.cmpi eq, %22, %25 : vector<16x128xi32>
    %cst_18 = arith.constant -1.000000e+30 : f32
    %27 = vector.broadcast %cst_18 : f32 to vector<16x128xf32>
    %28 = arith.select %24, %21, %27 : vector<16x128xi1>, vector<16x128xf32>
    %cst_19 = arith.constant dense<0xFF800000> : vector<16xf32>
    %29 = vector.multi_reduction <maximumf>, %28, %cst_19 [1] : vector<16x128xf32> to vector<16xf32>
    %30 = vector.shape_cast %29 : vector<16xf32> to vector<16x1xf32>
    %31 = vector.broadcast %30 : vector<16x1xf32> to vector<16x128xf32>
    %32 = arith.subf %28, %31 : vector<16x128xf32>
    %33 = math.exp %32 : vector<16x128xf32>
    %cst_20 = arith.constant dense<0.000000e+00> : vector<16xf32>
    %34 = vector.multi_reduction <add>, %33, %cst_20 [1] : vector<16x128xf32> to vector<16xf32>
    %35 = vector.shape_cast %34 : vector<16xf32> to vector<16x1xf32>
    %36 = tpu.reciprocal %35 {approx = true} : vector<16x1xf32> -> vector<16x1xf32>
    %37 = vector.broadcast %36 : vector<16x1xf32> to vector<16x128xf32>
    %38 = arith.mulf %33, %37 : vector<16x128xf32>
    %39 = arith.select %26, %21, %38 : vector<16x128xi1>, vector<16x128xf32>
    %40 = arith.truncf %39 : vector<16x128xf32> to vector<16x128xbf16>
    %c0_21 = arith.constant 0 : index
    %c0_22 = arith.constant 0 : index
    %41 = vector.load %arg8[%c0_21, %c0_22] : memref<16x128xbf16, #tpu.memory_space<vmem>>, vector<16x128xbf16>
    tpu.vector_store %arg8[%c0_21, %c0_22], %40 {strides = array<i32>} : memref<16x128xbf16, #tpu.memory_space<vmem>>, vector<16x128xbf16>,
    return
  }
  func.func @transform_0(%arg0: i32) -> (i32, i32) {
    %c0_i32 = arith.constant 0 : i32
    %c0_i32_0 = arith.constant 0 : i32
    return %arg0, %c0_i32 : i32, i32
  }
  func.func @transform_1(%arg0: i32) -> (i32, i32) {
    %c0_i32 = arith.constant 0 : i32
    %c0_i32_0 = arith.constant 0 : i32
    %c0_i32_1 = arith.constant 0 : i32
    return %c0_i32, %c0_i32_0 : i32, i32
  }
  func.func @transform_2(%arg0: i32) -> (i32, i32) {
    %c0_i32 = arith.constant 0 : i32
    %c0_i32_0 = arith.constant 0 : i32
    %c0_i32_1 = arith.constant 0 : i32
    return %c0_i32, %c0_i32_0 : i32, i32
  }
  func.func @transform_3(%arg0: i32) -> (i32, i32) {
    %c0_i32 = arith.constant 0 : i32
    %c0_i32_0 = arith.constant 0 : i32
    %c0_i32_1 = arith.constant 0 : i32
    return %c0_i32, %c0_i32_0 : i32, i32
  }
  func.func @transform_4(%arg0: i32) -> (i32, i32) {
    %c0_i32 = arith.constant 0 : i32
    %c0_i32_0 = arith.constant 0 : i32
    %c0_i32_1 = arith.constant 0 : i32
    return %c0_i32, %c0_i32_0 : i32, i32
  }
  func.func @transform_5(%arg0: i32) -> (i32, i32) {
    %c0_i32 = arith.constant 0 : i32
    %c0_i32_0 = arith.constant 0 : i32
    %c0_i32_1 = arith.constant 0 : i32
    return %c0_i32, %c0_i32_0 : i32, i32
  }
  func.func @transform_6(%arg0: i32) -> (i32, i32) {
    %c0_i32 = arith.constant 0 : i32
    %c0_i32_0 = arith.constant 0 : i32
    %c0_i32_1 = arith.constant 0 : i32
    return %c0_i32, %c0_i32_0 : i32, i32
  }
  func.func @transform_7(%arg0: i32) -> (i32, i32) {
    %c0_i32 = arith.constant 0 : i32
    %c0_i32_0 = arith.constant 0 : i32
    return %arg0, %c0_i32 : i32, i32
  }
}

</mosaic_0001>

<llo_original>
// kernel: tpu_custom_call.1
$region0: #{tpu_custom_call.1}
  #allocation0 [shape = 'u32[]', space=smem, size = 0x4, offset = 0x4, fixed_abs, tag = 'smem constant byte address 0x4 - core index']
  #allocation1 [shape = 'u32[144,128]{1,0:T(1,128)}', space=vmem, size = 0x12000, scoped, tag = 'internal scratch']
  %s0 = inlined_call_operand.hbm [shape: bf16[16,16], index: 0, kind: input, shape index: {}]
  %s1 = inlined_call_operand.hbm [shape: bf16[16,32], index: 1, kind: input, shape index: {}]
  %s2 = inlined_call_operand.vmem [shape: f32[1,32], index: 2, kind: input, shape index: {}]
  %s3 = inlined_call_operand.hbm [shape: bf16[32,32], index: 3, kind: input, shape index: {}]
  %s4 = inlined_call_operand.vmem [shape: f32[1,32], index: 4, kind: input, shape index: {}]
  %s5 = inlined_call_operand.vmem [shape: bf16[32,128], index: 5, kind: input, shape index: {}]
  %s6 = inlined_call_operand.vmem [shape: f32[1,128], index: 6, kind: input, shape index: {}]
  %s7 = inlined_call_operand.hbm [shape: bf16[16,128], index: 7, kind: output, shape index: {}]
  %s8 = sld [smem:[#allocation0]]
  $region50: #{tpu_custom_call.1} parent=0
    _
  %s10 = ssub.s32 1, %s8
  %s11 = scalar_select 0, %s10, %s8
  $region1: #{tpu_custom_call.1} parent=0
    #allocation2 [shape = 'u8[4096]{0}', space=vmem, size = 0x1000, scoped, tag = 'input window, operand 0, single buffered']
    #allocation3 [shape = 's32[1]{0}', space=sflag, size = 0x4, scoped, tag = 'scoped memory for tpu_custom_call.1']
    #allocation4 [shape = 's32[1]{0}', space=sflag, size = 0x4, scoped, tag = 'scoped memory for tpu_custom_call.1']
    #allocation5 [shape = 'u8[4096]{0}', space=vmem, size = 0x1000, scoped, tag = 'input window, operand 1, single buffered']
    #allocation6 [shape = 's32[1]{0}', space=sflag, size = 0x4, scoped, tag = 'scoped memory for tpu_custom_call.1']
    #allocation7 [shape = 'u8[8192]{0}', space=vmem, size = 0x2000, scoped, tag = 'input window, operand 3, single buffered']
    #allocation8 [shape = 'u8[4096]{0}', space=vmem, size = 0x1000, scoped, tag = 'output window, operand 0, single buffered']
    %12 = vsyncpa [#allocation3], 0
    %13 = vsyncpa [#allocation6], 0
    %14 = vsyncpa [#allocation4], 0
    // Predicated region
    $region2: #{tpu_custom_call.1} parent=1 // pred_check
      _
    $region3: #{tpu_custom_call.1} parent=1 // pred_check_branch
      %16 = sbr.rel (0) target = $region5
    $region4: #{tpu_custom_call.1} parent=1 // pred_region
      %s18 = ssub.s32 128, 128
      %19 = vsyncadd [#allocation3], %s18
      %s20 = sshll.u32 [#allocation2], 4
      %s21 = int_to_ptr.vmem [resolvable:$true] %s20
      %26 = dma.hbm_to_vmem [thread:$0]  %s0, 128, %s21, [#allocation3], 64, 64, 4
    $region5: #{tpu_custom_call.1} parent=1 // pred_fallthru
      _
    // Predicated region
    $region6: #{tpu_custom_call.1} parent=1 // pred_check
      _
    $region7: #{tpu_custom_call.1} parent=1 // pred_check_branch
      %28 = sbr.rel (0) target = $region9
    $region8: #{tpu_custom_call.1} parent=1 // pred_region
      %s30 = ssub.s32 128, 128
      %31 = vsyncadd [#allocation6], %s30
      %s32 = sshll.u32 [#allocation5], 4
      %s33 = int_to_ptr.vmem [resolvable:$true] %s32
      %38 = dma.hbm_to_vmem [thread:$0]  %s1, 128, %s33, [#allocation6], 64, 64, 4
    $region9: #{tpu_custom_call.1} parent=1 // pred_fallthru
      _
    // Predicated region
    $region10: #{tpu_custom_call.1} parent=1 // pred_check
      _
    $region11: #{tpu_custom_call.1} parent=1 // pred_check_branch
      %40 = sbr.rel (0) target = $region13
    $region12: #{tpu_custom_call.1} parent=1 // pred_region
      _
    $region13: #{tpu_custom_call.1} parent=1 // pred_fallthru
      _
    // Predicated region
    $region14: #{tpu_custom_call.1} parent=1 // pred_check
      _
    $region15: #{tpu_custom_call.1} parent=1 // pred_check_branch
      %42 = sbr.rel (0) target = $region17
    $region16: #{tpu_custom_call.1} parent=1 // pred_region
      %s44 = ssub.s32 256, 256
      %45 = vsyncadd [#allocation6], %s44
      %s46 = sshll.u32 [#allocation7], 4
      %s47 = int_to_ptr.vmem [resolvable:$true] %s46
      %52 = dma.hbm_to_vmem [thread:$0]  %s3, 256, %s47, [#allocation6], 64, 64, 4
    $region17: #{tpu_custom_call.1} parent=1 // pred_fallthru
      _
    // Predicated region
    $region18: #{tpu_custom_call.1} parent=1 // pred_check
      _
    $region19: #{tpu_custom_call.1} parent=1 // pred_check_branch
      %54 = sbr.rel (0) target = $region21
    $region20: #{tpu_custom_call.1} parent=1 // pred_region
      _
    $region21: #{tpu_custom_call.1} parent=1 // pred_fallthru
      _
    // Predicated region
    $region22: #{tpu_custom_call.1} parent=1 // pred_check
      _
    $region23: #{tpu_custom_call.1} parent=1 // pred_check_branch
      %56 = sbr.rel (0) target = $region25
    $region24: #{tpu_custom_call.1} parent=1 // pred_region
      _
    $region25: #{tpu_custom_call.1} parent=1 // pred_fallthru
      _
    // Predicated region
    $region26: #{tpu_custom_call.1} parent=1 // pred_check
      _
    $region27: #{tpu_custom_call.1} parent=1 // pred_check_branch
      %58 = sbr.rel (0) target = $region29
    $region28: #{tpu_custom_call.1} parent=1 // pred_region
      _
    $region29: #{tpu_custom_call.1} parent=1 // pred_fallthru
      _
    // Predicated region
    $region30: #{tpu_custom_call.1} parent=1 // pred_check
      _
    $region31: #{tpu_custom_call.1} parent=1 // pred_check_branch
      %60 = sbr.rel (0) target = $region33
    $region32: #{tpu_custom_call.1} parent=1 // pred_region
      %61 = dma.done [#allocation3], 128
    $region33: #{tpu_custom_call.1} parent=1 // pred_fallthru
      _
    // Predicated region
    $region34: #{tpu_custom_call.1} parent=1 // pred_check
      _
    $region35: #{tpu_custom_call.1} parent=1 // pred_check_branch
      %63 = sbr.rel (0) target = $region37
    $region36: #{tpu_custom_call.1} parent=1 // pred_region
      %64 = dma.done [#allocation6], 128
    $region37: #{tpu_custom_call.1} parent=1 // pred_fallthru
      _
    // Predicated region
    $region38: #{tpu_custom_call.1} parent=1 // pred_check
      _
    $region39: #{tpu_custom_call.1} parent=1 // pred_check_branch
      %66 = sbr.rel (0) target = $region41
    $region40: #{tpu_custom_call.1} parent=1 // pred_region
      %67 = dma.done [#allocation6], 256
    $region41: #{tpu_custom_call.1} parent=1 // pred_fallthru
      _
    %v69 = vld [vmem:[#allocation2] sm:$0xf]
    %v70 = vld [vmem:[#allocation2 + $0x4] sm:$0xf]
    %v71 = vld [vmem:[#allocation5] sm:$0xf]
    %v72 = vld [vmem:[#allocation5 + $0x4] sm:$0xf]
    %v73 = vld [vmem:[%s2] sm:$0x1]
    %v75 = vlaneseq
    %v76 = vshrl.u32 %v75, 7
    %v77 = vsub.s32 0, %v76
    %v78 = vrot.slane %v73, %v77
    %v82 = vunpack.c.l.b16 %v69
    %v83 = vunpack.c.l.b16 %v70
    %v84 = vpack.c.b16 %v83, %v82
    %v87 = vunpack.c.l.b16 %v71
    %v88 = vunpack.c.l.b16 %v72
    %v89 = vpack.c.b16 %v88, %v87
    %vm91 = vcmask 130048
    %v93 = vsel %vm91, %v84, 0
    %95 = vmatprep.subr.bf16.mxu0 0
    %96 = vmatpush1.bf16.msra.mxu0 %v89
    %97 = vmatprep.subr.bf16.mxu0 0
    %98 = vmatpush1.bf16.msra.mxu0 0
    %99 = vmatprep.subr.bf16.mxu0 0
    %100 = vmatpush1.bf16.msra.mxu0 0
    %101 = vmatprep.subr.bf16.mxu0 0
    %102 = vmatpush1.bf16.msra.mxu0 0
    %103 = vmatprep.subr.bf16.mxu0 0
    %104 = vmatpush1.bf16.msra.mxu0 0
    %105 = vmatprep.subr.bf16.mxu0 0
    %106 = vmatpush1.bf16.msra.mxu0 0
    %107 = vmatprep.subr.bf16.mxu0 0
    %108 = vmatpush1.bf16.msra.mxu0 0
    %109 = vmatprep.subr.bf16.mxu0 0
    %110 = vmatpush1.bf16.msra.mxu0 0
    %111 = vmatprep.subr.bf16.mxu0 0
    %112 = vmatpush1.bf16.msra.mxu0 0
    %113 = vmatprep.subr.bf16.mxu0 0
    %114 = vmatpush1.bf16.msra.mxu0 0
    %115 = vmatprep.subr.bf16.mxu0 0
    %116 = vmatpush1.bf16.msra.mxu0 0
    %117 = vmatprep.subr.bf16.mxu0 0
    %118 = vmatpush1.bf16.msra.mxu0 0
    %119 = vmatprep.subr.bf16.mxu0 0
    %120 = vmatpush1.bf16.msra.mxu0 0
    %121 = vmatprep.subr.bf16.mxu0 0
    %122 = vmatpush1.bf16.msra.mxu0 0
    %123 = vmatprep.subr.bf16.mxu0 0
    %124 = vmatpush1.bf16.msra.mxu0 0
    %125 = vmatprep.subr.bf16.mxu0 0
    %126 = vmatpush1.bf16.msra.mxu0 0
    %127 = vmatprep.mubr.bf16.mxu0 0
    %128 = vmatmul.mubr.bf16.gmra.mrb[0].mxu0 %v93
    %v129 = vpop.f32.mrb[0].mxu0
    %v130 = vadd.f32 %v78, %v129
    %v131 = vpop.f32.mrb[0].mxu0
    %v132 = vpop.f32.mrb[0].mxu0
    %v133 = vadd.f32 %v78, %v132
    %v134 = vpop.f32.mrb[0].mxu0
    %135 = vdwg.mxu0
    %v136 = vmax.f32 %v130, 0.0
    %v137 = vmax.f32 %v133, 0.0
    %v138 = vpack.c.bf16 %v137, %v136
    %v139 = vld [vmem:[#allocation7] sm:$0xf]
    %v140 = vld [vmem:[#allocation7 + $0x4] sm:$0xf]
    %v141 = vld [vmem:[#allocation7 + $0x8] sm:$0xf]
    %v142 = vld [vmem:[#allocation7 + $0xc] sm:$0xf]
    %v143 = vld [vmem:[%s4] sm:$0x1]
    %v145 = vlaneseq
    %v146 = vshrl.u32 %v145, 7
    %v147 = vsub.s32 0, %v146
    %v148 = vrot.slane %v143, %v147
    %v154 = vunpack.c.l.b16 %v139
    %v155 = vunpack.c.l.b16 %v140
    %v156 = vunpack.c.l.b16 %v141
    %v157 = vunpack.c.l.b16 %v142
    %v158 = vpack.c.b16 %v155, %v154
    %v159 = vpack.c.b16 %v157, %v156
    %vm162 = vcmask 261120
    %v164 = vsel %vm162, %v138, 0
    %166 = vmatprep.subr.bf16.mxu0 0
    %167 = vmatpush1.bf16.msra.mxu0 %v158
    %168 = vmatprep.subr.bf16.mxu0 0
    %169 = vmatpush1.bf16.msra.mxu0 %v159
    %170 = vmatprep.subr.bf16.mxu0 0
    %171 = vmatpush1.bf16.msra.mxu0 0
    %172 = vmatprep.subr.bf16.mxu0 0
    %173 = vmatpush1.bf16.msra.mxu0 0
    %174 = vmatprep.subr.bf16.mxu0 0
    %175 = vmatpush1.bf16.msra.mxu0 0
    %176 = vmatprep.subr.bf16.mxu0 0
    %177 = vmatpush1.bf16.msra.mxu0 0
    %178 = vmatprep.subr.bf16.mxu0 0
    %179 = vmatpush1.bf16.msra.mxu0 0
    %180 = vmatprep.subr.bf16.mxu0 0
    %181 = vmatpush1.bf16.msra.mxu0 0
    %182 = vmatprep.subr.bf16.mxu0 0
    %183 = vmatpush1.bf16.msra.mxu0 0
    %184 = vmatprep.subr.bf16.mxu0 0
    %185 = vmatpush1.bf16.msra.mxu0 0
    %186 = vmatprep.subr.bf16.mxu0 0
    %187 = vmatpush1.bf16.msra.mxu0 0
    %188 = vmatprep.subr.bf16.mxu0 0
    %189 = vmatpush1.bf16.msra.mxu0 0
    %190 = vmatprep.subr.bf16.mxu0 0
    %191 = vmatpush1.bf16.msra.mxu0 0
    %192 = vmatprep.subr.bf16.mxu0 0
    %193 = vmatpush1.bf16.msra.mxu0 0
    %194 = vmatprep.subr.bf16.mxu0 0
    %195 = vmatpush1.bf16.msra.mxu0 0
    %196 = vmatprep.subr.bf16.mxu0 0
    %197 = vmatpush1.bf16.msra.mxu0 0
    %198 = vmatprep.mubr.bf16.mxu0 0
    %199 = vmatmul.mubr.bf16.gmra.mrb[0].mxu0 %v164
    %v200 = vpop.f32.mrb[0].mxu0
    %v201 = vadd.f32 %v148, %v200
    %v202 = vpop.f32.mrb[0].mxu0
    %v203 = vpop.f32.mrb[0].mxu0
    %v204 = vadd.f32 %v148, %v203
    %v205 = vpop.f32.mrb[0].mxu0
    %206 = vdwg.mxu0
    %v207 = vmax.f32 %v201, 0.0
    %v208 = vmax.f32 %v204, 0.0
    %v209 = vpack.c.bf16 %v208, %v207
    %v210 = vld [vmem:[%s5] sm:$0xf]
    %v211 = vld [vmem:[%s5 + $0x4] sm:$0xf]
    %v212 = vld [vmem:[%s5 + $0x8] sm:$0xf]
    %v213 = vld [vmem:[%s5 + $0xc] sm:$0xf]
    %v214 = vld [vmem:[%s6] sm:$0x1]
    %v216 = vlaneseq
    %v217 = vshrl.u32 %v216, 7
    %v218 = vsub.s32 0, %v217
    %v219 = vrot.slane %v214, %v218
    %v225 = vunpack.c.l.b16 %v210
    %v226 = vunpack.c.l.b16 %v211
    %v227 = vunpack.c.l.b16 %v212
    %v228 = vunpack.c.l.b16 %v213
    %v229 = vpack.c.b16 %v226, %v225
    %v230 = vpack.c.b16 %v228, %v227
    %v234 = vsel %vm162, %v209, 0
    %236 = vmatprep.subr.bf16.mxu0 0
    %237 = vmatpush1.bf16.msra.mxu0 %v229
    %238 = vmatprep.subr.bf16.mxu0 0
    %239 = vmatpush1.bf16.msra.mxu0 %v230
    %240 = vmatprep.subr.bf16.mxu0 0
    %241 = vmatpush1.bf16.msra.mxu0 0
    %242 = vmatprep.subr.bf16.mxu0 0
    %243 = vmatpush1.bf16.msra.mxu0 0
    %244 = vmatprep.subr.bf16.mxu0 0
    %245 = vmatpush1.bf16.msra.mxu0 0
    %246 = vmatprep.subr.bf16.mxu0 0
    %247 = vmatpush1.bf16.msra.mxu0 0
    %248 = vmatprep.subr.bf16.mxu0 0
    %249 = vmatpush1.bf16.msra.mxu0 0
    %250 = vmatprep.subr.bf16.mxu0 0
    %251 = vmatpush1.bf16.msra.mxu0 0
    %252 = vmatprep.subr.bf16.mxu0 0
    %253 = vmatpush1.bf16.msra.mxu0 0
    %254 = vmatprep.subr.bf16.mxu0 0
    %255 = vmatpush1.bf16.msra.mxu0 0
    %256 = vmatprep.subr.bf16.mxu0 0
    %257 = vmatpush1.bf16.msra.mxu0 0
    %258 = vmatprep.subr.bf16.mxu0 0
    %259 = vmatpush1.bf16.msra.mxu0 0
    %260 = vmatprep.subr.bf16.mxu0 0
    %261 = vmatpush1.bf16.msra.mxu0 0
    %262 = vmatprep.subr.bf16.mxu0 0
    %263 = vmatpush1.bf16.msra.mxu0 0
    %264 = vmatprep.subr.bf16.mxu0 0
    %265 = vmatpush1.bf16.msra.mxu0 0
    %266 = vmatprep.subr.bf16.mxu0 0
    %267 = vmatpush1.bf16.msra.mxu0 0
    %268 = vmatprep.mubr.bf16.mxu0 0
    %269 = vmatmul.mubr.bf16.gmra.mrb[0].mxu0 %v234
    %v270 = vpop.f32.mrb[0].mxu0
    %v271 = vadd.f32 %v219, %v270
    %v272 = vpop.f32.mrb[0].mxu0
    %v273 = vpop.f32.mrb[0].mxu0
    %v274 = vadd.f32 %v219, %v273
    %v275 = vpop.f32.mrb[0].mxu0
    %276 = vdwg.mxu0
    %v277 = vlaneseq
    %v278 = vand.u32 %v277, 127
    %vm279 = vcmp.lt.s32.totalorder %v278, 4
    %vm280 = vcmp.eq.s32.totalorder %v278, 4
    %v281 = vsel %vm279, %v271, -1e+30
    %v282 = vsel %vm279, %v274, -1e+30
    %283 = vmax.xlane.f32.xlu0 %v281
    %v284 = vpop.xlane.xlu0 %283
    %285 = vmax.xlane.f32.xlu0 %v282
    %v286 = vpop.xlane.xlu0 %285
    %v287 = vsub.f32 %v281, %v284
    %v288 = vsub.f32 %v282, %v286
    %v289 = vmul.f32 %v287, 1.442695
    %v290 = vpow.pop %v289
    %v291 = vmul.f32 %v288, 1.442695
    %v292 = vpow.pop %v291
    %293 = vadd.xlane.f32.xlu0 %v290
    %v294 = vpop.xlane.xlu0 %293
    %295 = vadd.xlane.f32.xlu0 %v292
    %v296 = vpop.xlane.xlu0 %295
    %v297 = vrcp.pop %v294
    %v298 = vrcp.pop %v296
    %v299 = vmul.f32 %v290, %v297
    %v300 = vmul.f32 %v292, %v298
    %v301 = vsel %vm280, %v271, %v299
    %v302 = vsel %vm280, %v274, %v300
    %v303 = vpack.c.bf16 %v302, %v301
    %v305 = vunpack.c.l.b16 %v303
    %v306 = vunpack.c.h.b16 %v303
    %v307 = vpack.c.b16 %v305, %v305
    %v308 = vpack.c.b16 %v306, %v306
    %311 = vst [vmem:[#allocation8] sm:$0xf] %v307
    %312 = vst [vmem:[#allocation8 + $0x4] sm:$0xf] %v308
    // Predicated region
    $region42: #{tpu_custom_call.1} parent=1 // pred_check
      _
    $region43: #{tpu_custom_call.1} parent=1 // pred_check_branch
      %314 = sbr.rel (0) target = $region45
    $region44: #{tpu_custom_call.1} parent=1 // pred_region
      %s316 = ssub.s32 128, 128
      %317 = vsyncadd [#allocation4], %s316
      %s318 = sshll.u32 [#allocation8], 4
      %s319 = int_to_ptr.vmem [resolvable:$true] %s318
      %324 = dma.vmem_to_hbm [thread:$0]  %s319, 128, %s7, [#allocation4], 64, 64, 4
    $region45: #{tpu_custom_call.1} parent=1 // pred_fallthru
      _
    // Predicated region
    $region46: #{tpu_custom_call.1} parent=1 // pred_check
      _
    $region47: #{tpu_custom_call.1} parent=1 // pred_check_branch
      %326 = sbr.rel (0) target = $region49
    $region48: #{tpu_custom_call.1} parent=1 // pred_region
      %327 = dma.done [#allocation4], 128
    $region49: #{tpu_custom_call.1} parent=1 // pred_fallthru
      _
    %328 = vsyncpa [#allocation3], 1
    %329 = vsyncpa [#allocation6], 1
    %330 = vsyncpa [#allocation4], 1

</llo_original>
